<compile_context>
chip_gen: v7x
topology: tpu7x:2x2x1
jax: 0.10.0
libtpu: 0.0.40
codegen_flags: <defaults>
</compile_context>

<pallas_src>
import functools
import math

import jax
import jax.numpy as jnp
from jax.experimental import pallas as pl
from jax.experimental.pallas import tpu as pltpu

# ---- module constants (from the PyTorch spec) ------------------------------
D_MODEL = 512
D_K = 64
D_V = 64
N_HEAD = 8
D_FF = 2048
VOCAB = 25002
PAD_ID = 25001


# ============================ Pallas kernels =================================

def _ln_stats_and_store(x, g_ref, b_ref, o_ref, eps, inv_d):
    """x is a (rows_tile, D) f32 block; normalize each row over the lane axis."""
    # One-pass statistics: sum(x) and sum(x*x) issued back-to-back on the XLU.
    sum_x = jnp.sum(x, axis=-1, keepdims=True)
    sum_x2 = jnp.sum(x * x, axis=-1, keepdims=True)
    mean = sum_x * inv_d                                    # mul, not div
    var = jnp.maximum(sum_x2 * inv_d - mean * mean, 0.0)    # guard cancellation
    inv = jax.lax.rsqrt(var + eps)                          # EUP slot (free-ish)
    # g_ref/b_ref are already f32 (cast once in the wrapper), shape (1, D).
    o_ref[...] = (((x - mean) * inv) * g_ref[...] + b_ref[...]).astype(o_ref.dtype)


def _ln_kernel(x_ref, g_ref, b_ref, o_ref, *, eps, inv_d):
    x = x_ref[...].astype(jnp.float32)
    _ln_stats_and_store(x, g_ref, b_ref, o_ref, eps, inv_d)


def _add_ln_kernel(x_ref, r_ref, g_ref, b_ref, o_ref, *, eps, inv_d):
    # Fused residual add: LN(x + residual) in a single HBM read+write pass.
    x = x_ref[...].astype(jnp.float32) + r_ref[...].astype(jnp.float32)
    _ln_stats_and_store(x, g_ref, b_ref, o_ref, eps, inv_d)


def _pick_block_rows(n_rows, d, itemsize, target_tile_bytes, min_steps=4):
    """Row-tile size:
      * multiple of the sublane packing for the input dtype,
      * budgeted against the *f32* in-kernel footprint (temporaries are f32),
      * forced to give the grid >= min_steps steps when possible, so v7x's
        two TensorCores both get work (harmless no-op on single-TC v5e/v6e).
    """
    row_mult = 8 * max(1, 4 // itemsize)        # f32 -> 8, bf16 -> 16, int8 -> 32
    f32_itemsize = max(itemsize, 4)             # budget by the f32 compute footprint
    cap = (target_tile_bytes // (d * f32_itemsize)) // row_mult * row_mult
    cap = max(row_mult, cap)
    if n_rows <= row_mult:
        return n_rows                           # single full block (always legal)
    per_step = -(-n_rows // min_steps)          # cdiv
    per_step = ((per_step + row_mult - 1) // row_mult) * row_mult
    return max(row_mult, min(cap, per_step))


def layer_norm(x, gamma, beta, *, residual=None, eps=1e-6,
               target_tile_bytes=2 * 1024 * 1024):
    """LayerNorm over the last dim of x (optionally fused with a residual add),
    matching torch.nn.LayerNorm(D, eps)(x [+ residual])."""
    orig_shape = x.shape
    d = orig_shape[-1]
    x2 = x.reshape(-1, d)                        # (rows, D); no HBM padding copy
    n_rows = x2.shape[0]
    gamma2 = gamma.reshape(1, d).astype(jnp.float32)   # cast once, outside the grid
    beta2 = beta.reshape(1, d).astype(jnp.float32)

    itemsize = jnp.dtype(x.dtype).itemsize
    block_rows = _pick_block_rows(n_rows, d, itemsize, target_tile_bytes)
    grid = (pl.cdiv(n_rows, block_rows),)        # ragged tail masked by Pallas

    row_spec = pl.BlockSpec((block_rows, d), lambda i: (i, 0))
    vec_spec = pl.BlockSpec((1, d), lambda i: (0, 0))

    if residual is None:
        kernel = functools.partial(_ln_kernel, eps=float(eps), inv_d=1.0 / float(d))
        in_specs = [row_spec, vec_spec, vec_spec]
        args = (x2, gamma2, beta2)
    else:
        r2 = residual.reshape(-1, d)
        kernel = functools.partial(_add_ln_kernel, eps=float(eps), inv_d=1.0 / float(d))
        in_specs = [row_spec, row_spec, vec_spec, vec_spec]
        args = (x2, r2, gamma2, beta2)

    out = pl.pallas_call(
        kernel,
        out_shape=jax.ShapeDtypeStruct((n_rows, d), x.dtype),
        grid_spec=pltpu.PrefetchScalarGridSpec(
            num_scalar_prefetch=0,
            grid=grid,
            in_specs=in_specs,
            out_specs=row_spec,
        ),
        compiler_params=pltpu.CompilerParams(
            # Row tiles are independent -> shard grid steps across v7x's 2 TCs.
            dimension_semantics=("parallel",),
            # Raise the scoped VMEM budget (v5e default is only 16 MiB); 32 MiB
            # is safe on all gens (v7x physical VMEM is 64 MiB) with headroom.
            vmem_limit_bytes=32 * 1024 * 1024,
        ),
    )(*args)

    return out.reshape(orig_shape)


def layer_norm_ref(x, gamma, beta, eps=1e-6):
    x32 = x.astype(jnp.float32)
    mean = jnp.mean(x32, axis=-1, keepdims=True)
    var = jnp.mean((x32 - mean) ** 2, axis=-1, keepdims=True)
    y = (x32 - mean) * jax.lax.rsqrt(var + eps)
    y = y * gamma.astype(jnp.float32) + beta.astype(jnp.float32)
    return y.astype(x.dtype)


# ==================== Decoder forward (JAX + Pallas LN) ======================

def _lin(key, shape):
    return 0.02 * jax.random.normal(key, shape, dtype=jnp.float32)


def _mha_params(key):
    ks = jax.random.split(key, 4)
    return dict(
        w_q=_lin(ks[0], (D_MODEL, N_HEAD * D_K)),
        w_k=_lin(ks[1], (D_MODEL, N_HEAD * D_K)),
        w_v=_lin(ks[2], (D_MODEL, N_HEAD * D_V)),
        w_o=_lin(ks[3], (N_HEAD * D_V, D_MODEL)),
        ln_g=jnp.ones((D_MODEL,), jnp.float32),     # PyTorch LayerNorm init
        ln_b=jnp.zeros((D_MODEL,), jnp.float32),
    )


def init_decoder_params(key, n_layers):
    kemb, *klayers = jax.random.split(key, 1 + n_layers)
    layers = []
    for kl in klayers:
        k_sa, k_ea, k_w1, k_w2 = jax.random.split(kl, 4)
        layers.append(dict(
            self_attn=_mha_params(k_sa),
            enc_attn=_mha_params(k_ea),
            ffn=dict(
                w1=_lin(k_w1, (D_MODEL, D_FF)),
                w2=_lin(k_w2, (D_FF, D_MODEL)),
                ln_g=jnp.ones((D_MODEL,), jnp.float32),   # fresh default LN each fwd
                ln_b=jnp.zeros((D_MODEL,), jnp.float32),
            ),
        ))
    return dict(emb=0.02 * jax.random.normal(kemb, (VOCAB, D_MODEL), jnp.float32),
                layers=layers)


def positional_encoding(length, d_model):
    pos = jnp.arange(length, dtype=jnp.float32)[:, None]
    div = jnp.exp(jnp.arange(0, d_model, 2, dtype=jnp.float32)
                  * (-math.log(10000.0) / d_model))
    ang = pos * div
    pe = jnp.stack([jnp.sin(ang), jnp.cos(ang)], axis=-1).reshape(length, d_model)
    return pe[None]


def get_attn_pad_mask(seq_q, seq_k):
    b, lq = seq_q.shape
    lk = seq_k.shape[1]
    pad = (seq_k == PAD_ID)[:, None, :]
    return jnp.broadcast_to(pad, (b, lq, lk))


def get_attn_subsequence_mask(seq):
    b, l = seq.shape
    sub = jnp.triu(jnp.ones((l, l), dtype=jnp.int32), k=1)
    return jnp.broadcast_to(sub[None], (b, l, l))


def scaled_dot_product_attention(q, k, v, mask, scale):
    attn = jnp.einsum('bhqd,bhkd->bhqk', q / scale, k)
    if mask is not None:
        attn = jnp.where(mask, -1e9, attn)
    attn = jax.nn.softmax(attn, axis=-1)
    out = jnp.einsum('bhqk,bhkd->bhqd', attn, v)
    return out, attn


def multi_head_attention(p, q, k, v, mask):
    b, lq, _ = q.shape
    lk = k.shape[1]
    residual = q
    # Pre-LN on q/k/v with the module's (shared) LayerNorm, eps=1e-6.
    if q is k and k is v:
        qn = layer_norm(q, p['ln_g'], p['ln_b'], eps=1e-6)
        kn = vn = qn
    else:
        # In the Decoder k is v; batch the two distinct LN inputs (q rows and
        # k rows) into a single pallas_call to amortize launch overhead.
        stacked = jnp.concatenate(
            [q.reshape(-1, D_MODEL), k.reshape(-1, D_MODEL)], axis=0)
        normed = layer_norm(stacked, p['ln_g'], p['ln_b'], eps=1e-6)
        qn = normed[:b * lq].reshape(q.shape)
        kn = vn = normed[b * lq:].reshape(k.shape)

    qh = (qn @ p['w_q']).reshape(b, lq, N_HEAD, D_K).transpose(0, 2, 1, 3)
    kh = (kn @ p['w_k']).reshape(b, lk, N_HEAD, D_K).transpose(0, 2, 1, 3)
    vh = (vn @ p['w_v']).reshape(b, lk, N_HEAD, D_V).transpose(0, 2, 1, 3)
    m = None if mask is None else mask[:, None, :, :]
    ctx, attn = scaled_dot_product_attention(qh, kh, vh, m, math.sqrt(D_K))
    ctx = ctx.transpose(0, 2, 1, 3).reshape(b, lq, N_HEAD * D_V)
    out = ctx @ p['w_o']
    # TODO(synk): dropout omitted (identity at inference).
    # Fused residual-add + LayerNorm (single HBM pass).
    out = layer_norm(out, p['ln_g'], p['ln_b'], residual=residual, eps=1e-6)
    return out, attn


def pos_ffn(p, x):
    residual = x
    h = jax.nn.gelu(x @ p['w1'], approximate=False)   # exact GELU, as nn.GELU()
    out = h @ p['w2']
    # PoswiseFeedForwardNet builds a fresh default LayerNorm (eps=1e-5, gamma=1,
    # beta=0); fuse the residual add into the LN kernel here too.
    return layer_norm(out, p['ln_g'], p['ln_b'], residual=residual, eps=1e-5)


def decoder_forward(params, dec_inputs, enc_inputs, enc_outputs):
    _, l = dec_inputs.shape
    x = params['emb'][dec_inputs] * math.sqrt(D_MODEL)
    x = x + positional_encoding(l, D_MODEL)
    # TODO(synk): positional-encoding dropout omitted (identity at inference).
    self_mask = (get_attn_pad_mask(dec_inputs, dec_inputs).astype(jnp.int32)
                 + get_attn_subsequence_mask(dec_inputs)) > 0
    enc_mask = get_attn_pad_mask(dec_inputs, enc_inputs)
    self_attns, enc_attns = [], []
    for lp in params['layers']:
        x, sa = multi_head_attention(lp['self_attn'], x, x, x, self_mask)
        x, ea = multi_head_attention(lp['enc_attn'], x, enc_outputs, enc_outputs, enc_mask)
        x = pos_ffn(lp['ffn'], x)
        self_attns.append(sa)
        enc_attns.append(ea)
    return x, self_attns, enc_attns


# ================================== main =====================================

if __name__ == "__main__":
    key = jax.random.PRNGKey(0)
    k1, k2, k3, k4, k5 = jax.random.split(key, 5)

    # ---- standalone LN kernel correctness (small Decoder-like shapes) ----
    B, S, D = 2, 8, D_MODEL
    x = jax.random.normal(k1, (B, S, D), dtype=jnp.float32)
    res = jax.random.normal(k2, (B, S, D), dtype=jnp.float32)
    gamma = 1.0 + 0.1 * jax.random.normal(k3, (D,), dtype=jnp.float32)
    beta = 0.1 * jax.random.normal(k4, (D,), dtype=jnp.float32)

    out = jax.block_until_ready(layer_norm(x, gamma, beta, eps=1e-6))
    ref = layer_norm_ref(x, gamma, beta, eps=1e-6)
    assert out.shape == x.shape
    assert float(jnp.max(jnp.abs(out - ref))) < 1e-4

    # fused residual-add + LN
    out_f = jax.block_until_ready(layer_norm(x, gamma, beta, residual=res, eps=1e-6))
    ref_f = layer_norm_ref(x + res, gamma, beta, eps=1e-6)
    assert float(jnp.max(jnp.abs(out_f - ref_f))) < 1e-4

    # multi-step grid path (2048 rows -> 4 grid steps of 512 rows each)
    xl = jax.random.normal(k5, (2048, D), dtype=jnp.float32)
    out_l = jax.block_until_ready(layer_norm(xl, gamma, beta, eps=1e-6))
    ref_l = layer_norm_ref(xl, gamma, beta, eps=1e-6)
    assert float(jnp.max(jnp.abs(out_l - ref_l))) < 1e-4

    # ---- Decoder forward using the Pallas LN kernels at every LN site ----
    n_layers = 2   # reduced layer count for the demo; per-layer semantics unchanged
    pkey, dkey, ekey, okey = jax.random.split(jax.random.PRNGKey(0), 4)
    params = init_decoder_params(pkey, n_layers)
    dec_inputs = jax.random.randint(dkey, (2, 8), 0, 100)
    dec_inputs = dec_inputs.at[:, -1].set(PAD_ID)   # exercise the pad mask
    enc_inputs = jax.random.randint(ekey, (2, 8), 0, 100)
    enc_outputs = jax.random.normal(okey, (2, 8, D_MODEL), dtype=jnp.float32)

    dec_out, self_attns, enc_attns = decoder_forward(
        params, dec_inputs, enc_inputs, enc_outputs)
    dec_out = jax.block_until_ready(dec_out)
    assert dec_out.shape == (2, 8, D_MODEL)
    assert len(self_attns) == n_layers and len(enc_attns) == n_layers
    assert bool(jnp.all(jnp.isfinite(dec_out)))

    print("KERNEL_OK")
</pallas_src>

<mosaic_0001>
module attributes {stable_mosaic.version = 11 : i64} {
  func.func @_ln_kernel(%arg0: i32, %arg1: memref<8x512xf32, #tpu.memory_space<vmem>>, %arg2: memref<1x512xf32, #tpu.memory_space<vmem>>, %arg3: memref<1x512xf32, #tpu.memory_space<vmem>>, %arg4: memref<8x512xf32, #tpu.memory_space<vmem>>) attributes {dimension_semantics = [#tpu.dimension_semantics<parallel>], iteration_bounds = array<i64: 2>, scalar_prefetch = 0 : i64, scratch_operands = 0 : i64, tpu.core_type = #tpu.core_type<tc>, window_params = [{transform_indices = @transform_0, window_bounds = array<i64: 8, 512>}, {pipeline_mode = #tpu.pipeline_mode<synchronous>, transform_indices = @transform_1, window_bounds = array<i64: 1, 512>}, {pipeline_mode = #tpu.pipeline_mode<synchronous>, transform_indices = @transform_2, window_bounds = array<i64: 1, 512>}, {transform_indices = @transform_3, window_bounds = array<i64: 8, 512>}]} {
    %c0 = arith.constant 0 : index
    %c0_0 = arith.constant 0 : index
    %0 = vector.load %arg1[%c0, %c0_0] : memref<8x512xf32, #tpu.memory_space<vmem>>, vector<8x512xf32>
    %cst = arith.constant dense<0.000000e+00> : vector<8xf32>
    %1 = vector.multi_reduction <add>, %0, %cst [1] : vector<8x512xf32> to vector<8xf32>
    %2 = vector.shape_cast %1 : vector<8xf32> to vector<8x1xf32>
    %3 = arith.mulf %0, %0 : vector<8x512xf32>
    %cst_1 = arith.constant dense<0.000000e+00> : vector<8xf32>
    %4 = vector.multi_reduction <add>, %3, %cst_1 [1] : vector<8x512xf32> to vector<8xf32>
    %5 = vector.shape_cast %4 : vector<8xf32> to vector<8x1xf32>
    %cst_2 = arith.constant 0.001953125 : f32
    %6 = vector.broadcast %cst_2 : f32 to vector<8x1xf32>
    %7 = arith.mulf %2, %6 : vector<8x1xf32>
    %cst_3 = arith.constant 0.001953125 : f32
    %8 = vector.broadcast %cst_3 : f32 to vector<8x1xf32>
    %9 = arith.mulf %5, %8 : vector<8x1xf32>
    %10 = arith.mulf %7, %7 : vector<8x1xf32>
    %11 = arith.subf %9, %10 : vector<8x1xf32>
    %cst_4 = arith.constant 0.000000e+00 : f32
    %12 = vector.broadcast %cst_4 : f32 to vector<8x1xf32>
    %13 = arith.maximumf %11, %12 : vector<8x1xf32>
    %cst_5 = arith.constant 9.99999997E-7 : f32
    %14 = vector.broadcast %cst_5 : f32 to vector<8x1xf32>
    %15 = arith.addf %13, %14 : vector<8x1xf32>
    %16 = math.rsqrt %15 : vector<8x1xf32>
    %17 = vector.broadcast %7 : vector<8x1xf32> to vector<8x512xf32>
    %18 = arith.subf %0, %17 : vector<8x512xf32>
    %19 = vector.broadcast %16 : vector<8x1xf32> to vector<8x512xf32>
    %20 = arith.mulf %18, %19 : vector<8x512xf32>
    %c0_6 = arith.constant 0 : index
    %c0_7 = arith.constant 0 : index
    %21 = vector.load %arg2[%c0_6, %c0_7] : memref<1x512xf32, #tpu.memory_space<vmem>>, vector<1x512xf32>
    %22 = vector.broadcast %21 : vector<1x512xf32> to vector<8x512xf32>
    %23 = arith.mulf %20, %22 : vector<8x512xf32>
    %c0_8 = arith.constant 0 : index
    %c0_9 = arith.constant 0 : index
    %24 = vector.load %arg3[%c0_8, %c0_9] : memref<1x512xf32, #tpu.memory_space<vmem>>, vector<1x512xf32>
    %25 = vector.broadcast %24 : vector<1x512xf32> to vector<8x512xf32>
    %26 = arith.addf %23, %25 : vector<8x512xf32>
    %c0_10 = arith.constant 0 : index
    %c0_11 = arith.constant 0 : index
    %27 = vector.load %arg4[%c0_10, %c0_11] : memref<8x512xf32, #tpu.memory_space<vmem>>, vector<8x512xf32>
    tpu.vector_store %arg4[%c0_10, %c0_11], %26 {strides = array<i32>} : memref<8x512xf32, #tpu.memory_space<vmem>>, vector<8x512xf32>,
    return
  }
  func.func @transform_0(%arg0: i32) -> (i32, i32) {
    %c0_i32 = arith.constant 0 : i32
    %c0_i32_0 = arith.constant 0 : i32
    return %arg0, %c0_i32 : i32, i32
  }
  func.func @transform_1(%arg0: i32) -> (i32, i32) {
    %c0_i32 = arith.constant 0 : i32
    %c0_i32_0 = arith.constant 0 : i32
    %c0_i32_1 = arith.constant 0 : i32
    return %c0_i32, %c0_i32_0 : i32, i32
  }
  func.func @transform_2(%arg0: i32) -> (i32, i32) {
    %c0_i32 = arith.constant 0 : i32
    %c0_i32_0 = arith.constant 0 : i32
    %c0_i32_1 = arith.constant 0 : i32
    return %c0_i32, %c0_i32_0 : i32, i32
  }
  func.func @transform_3(%arg0: i32) -> (i32, i32) {
    %c0_i32 = arith.constant 0 : i32
    %c0_i32_0 = arith.constant 0 : i32
    return %arg0, %c0_i32 : i32, i32
  }
}

</mosaic_0001>

<llo_original>
// kernel: tpu_custom_call.1
$region0: #{tpu_custom_call.1}
  #allocation0 [shape = 'u32[]', space=smem, size = 0x4, offset = 0x4, fixed_abs, tag = 'smem constant byte address 0x4 - core index']
  #allocation1 [shape = 'u32[144,128]{1,0:T(1,128)}', space=vmem, size = 0x12000, scoped, tag = 'internal scratch']
  %s0 = inlined_call_operand.hbm [shape: f32[16,512], index: 0, kind: input, shape index: {}]
  %s1 = inlined_call_operand.hbm [shape: f32[1,512], index: 1, kind: input, shape index: {}]
  %s2 = inlined_call_operand.vmem [shape: f32[1,512], index: 2, kind: input, shape index: {}]
  %s3 = inlined_call_operand.hbm [shape: f32[16,512], index: 3, kind: output, shape index: {}]
  %s4 = sld [smem:[#allocation0]]
  $region53: #{tpu_custom_call.1} parent=0
    _
  %s6 = ssub.s32 1, %s4
  %s7 = scalar_select 0, %s6, %s4
  $region1: #{tpu_custom_call.1} parent=0
    #allocation2 [shape = 'u8[32768]{0}', space=vmem, size = 0x8000, scoped, tag = 'input window, operand 0']
    #allocation3 [shape = 's32[2]{0}', space=sflag, size = 0x8, scoped, tag = 'scoped memory for tpu_custom_call.1']
    #allocation4 [shape = 's32[2]{0}', space=sflag, size = 0x8, scoped, tag = 'scoped memory for tpu_custom_call.1']
    #allocation5 [shape = 'u8[2048]{0}', space=vmem, size = 0x800, scoped, tag = 'input window, operand 1, single buffered']
    #allocation6 [shape = 's32[1]{0}', space=sflag, size = 0x4, scoped, tag = 'scoped memory for tpu_custom_call.1']
    #allocation7 [shape = 'u8[32768]{0}', space=vmem, size = 0x8000, scoped, tag = 'output window, operand 0']
    %8 = vsyncpa [#allocation3], 0
    %s9 = scalar_lea.sflag [#allocation3], 1
    %10 = vsyncpa %s9, 0
    %11 = vsyncpa [#allocation6], 0
    %12 = vsyncpa [#allocation4], 0
    %s13 = scalar_lea.sflag [#allocation4], 1
    %14 = vsyncpa %s13, 0
    loop: start=0, step=1, limit=4
    $region2: #{tpu_custom_call.1} parent=1 // loop_pre_header
      _
    $region3: #{tpu_custom_call.1} parent=1 // loop_header
      %s16 = sphi 0, %s20
      %p17 = scmp.ge.s32.totalorder %s16, 4
      %s26 = sphi 0, %s28
      %s29 = sphi 0, %s26
      %s30 = sphi 0, %s29
      %s46 = sphi 0, %s30
      %s50 = sphi 0, %s50
      %s52 = sphi 0, %s50
      %s53 = sphi 0, %s52
      %s67 = sphi 0, %s53
      %s71 = sphi 0, %s71
      %s73 = sphi 0, %s71
      %s74 = sphi 0, %s73
      %s88 = sphi 0, %s74
      %s94 = sphi 0, %s96
      %s97 = sphi 0, %s94
      %s98 = sphi 0, %s97
      %s114 = sphi 0, %s98
    $region4: #{tpu_custom_call.1} parent=1 // loop_header_branch
      %19 = sbr.rel (%p17) target = $region8
    $region5: #{tpu_custom_call.1} parent=1 // loop_body
      %s21 = ssub.s32 %s16, 1
      %s22 = ssub.s32 %s16, 2
      %s23 = sadd.s32 %s16, 1
      %s24 = ssub.s32 %s16, %s23
      %p25 = scmp.eq.s32.totalorder %s24, 0
      %s27 = sadd.s32 %s26, 1
      %s28 = scalar_select %p25, %s26, %s27
      %p31 = pneg %p25
      %p32 = scmp.eq.s32.totalorder %s16, 1
      %p33 = por %p31, %p32
      %p34 = scmp.ne.s32.totalorder %s26, %s29
      %p35 = scmp.eq.s32.totalorder %s16, 0
      %p36 = por %p34, %p35
      %p37 = scmp.ne.s32.totalorder %s26, %s29
      %p38 = scmp.eq.s32.totalorder %s21, 1
      %p39 = por %p37, %p38
      %p40 = scmp.ne.s32.totalorder %s29, %s30
      %p41 = scmp.eq.s32.totalorder %s21, 0
      %p42 = por %p40, %p41
      %p43 = scmp.ne.s32.totalorder %s29, %s30
      %p44 = scmp.eq.s32.totalorder %s22, 1
      %p45 = por %p43, %p44
      %p47 = scmp.ne.s32.totalorder %s30, %s46
      %p48 = scmp.eq.s32.totalorder %s22, 0
      %p49 = por %p47, %p48
      %s51 = sadd.s32 %s50, 1
      %p54 = scmp.eq.s32.totalorder %s16, 1
      %p55 = scmp.ne.s32.totalorder %s50, %s52
      %p56 = scmp.eq.s32.totalorder %s16, 0
      %p57 = por %p55, %p56
      %p58 = scmp.ne.s32.totalorder %s50, %s52
      %p59 = scmp.eq.s32.totalorder %s21, 1
      %p60 = por %p58, %p59
      %p61 = scmp.ne.s32.totalorder %s52, %s53
      %p62 = scmp.eq.s32.totalorder %s21, 0
      %p63 = por %p61, %p62
      %p64 = scmp.ne.s32.totalorder %s52, %s53
      %p65 = scmp.eq.s32.totalorder %s22, 1
      %p66 = por %p64, %p65
      %p68 = scmp.ne.s32.totalorder %s53, %s67
      %p69 = scmp.eq.s32.totalorder %s22, 0
      %p70 = por %p68, %p69
      %s72 = sadd.s32 %s71, 1
      %p75 = scmp.eq.s32.totalorder %s16, 1
      %p76 = scmp.ne.s32.totalorder %s71, %s73
      %p77 = scmp.eq.s32.totalorder %s16, 0
      %p78 = por %p76, %p77
      %p79 = scmp.ne.s32.totalorder %s71, %s73
      %p80 = scmp.eq.s32.totalorder %s21, 1
      %p81 = por %p79, %p80
      %p82 = scmp.ne.s32.totalorder %s73, %s74
      %p83 = scmp.eq.s32.totalorder %s21, 0
      %p84 = por %p82, %p83
      %p85 = scmp.ne.s32.totalorder %s73, %s74
      %p86 = scmp.eq.s32.totalorder %s22, 1
      %p87 = por %p85, %p86
      %p89 = scmp.ne.s32.totalorder %s74, %s88
      %p90 = scmp.eq.s32.totalorder %s22, 0
      %p91 = por %p89, %p90
      %s92 = ssub.s32 %s16, %s23
      %p93 = scmp.eq.s32.totalorder %s92, 0
      %s95 = sadd.s32 %s94, 1
      %s96 = scalar_select %p93, %s94, %s95
      %p99 = pneg %p93
      %p100 = scmp.eq.s32.totalorder %s16, 1
      %p101 = por %p99, %p100
      %p102 = scmp.ne.s32.totalorder %s94, %s97
      %p103 = scmp.eq.s32.totalorder %s16, 0
      %p104 = por %p102, %p103
      %p105 = scmp.ne.s32.totalorder %s94, %s97
      %p106 = scmp.eq.s32.totalorder %s21, 1
      %p107 = por %p105, %p106
      %p108 = scmp.ne.s32.totalorder %s97, %s98
      %p109 = scmp.eq.s32.totalorder %s21, 0
      %p110 = por %p108, %p109
      %p111 = scmp.ne.s32.totalorder %s97, %s98
      %p112 = scmp.eq.s32.totalorder %s22, 1
      %p113 = por %p111, %p112
      %p115 = scmp.ne.s32.totalorder %s98, %s114
      %p116 = scmp.eq.s32.totalorder %s22, 0
      %p117 = por %p115, %p116
      %p118 = scmp.le.s32.totalorder 1, %s16
      %p119 = scmp.lt.s32.totalorder %s16, 3
      %p120 = pnand %p118, %p119
      %p121 = pneg %p120
      // Predicated region
      $region9: #{tpu_custom_call.1} parent=5 // pred_check
        _
      $region10: #{tpu_custom_call.1} parent=5 // pred_check_branch
        %123 = sbr.rel (%p120) target = $region12
      $region11: #{tpu_custom_call.1} parent=5 // pred_region
        %s124 = ssub.s32 %s16, 1
        // Predicated region
        $region13: #{tpu_custom_call.1} parent=11 // pred_check
          %p125 = pneg %p63
        $region14: #{tpu_custom_call.1} parent=11 // pred_check_branch
          %127 = sbr.rel (%p125) target = $region16
        $region15: #{tpu_custom_call.1} parent=11 // pred_region
          %s129 = ssub.s32 64, 64
          %130 = vsyncadd [#allocation6], %s129
          %s132 = sshll.u32 [#allocation5], 4
          %s133 = int_to_ptr.vmem [resolvable:$true] %s132
          %135 = dma.hbm_to_vmem [thread:$0]  %s1, 64, %s133, [#allocation6]
        $region16: #{tpu_custom_call.1} parent=11 // pred_fallthru
          _
        // Predicated region
        $region17: #{tpu_custom_call.1} parent=11 // pred_check
          %p136 = pneg %p84
        $region18: #{tpu_custom_call.1} parent=11 // pred_check_branch
          %138 = sbr.rel (%p136) target = $region20
        $region19: #{tpu_custom_call.1} parent=11 // pred_region
          _
        $region20: #{tpu_custom_call.1} parent=11 // pred_fallthru
          _
      $region12: #{tpu_custom_call.1} parent=5 // pred_fallthru
        _
      %p139 = scmp.lt.s32.totalorder %s16, 2
      // Predicated region
      $region21: #{tpu_custom_call.1} parent=5 // pred_check
        %p140 = pneg %p139
      $region22: #{tpu_custom_call.1} parent=5 // pred_check_branch
        %142 = sbr.rel (%p140) target = $region24
      $region23: #{tpu_custom_call.1} parent=5 // pred_region
        // Predicated region
        $region25: #{tpu_custom_call.1} parent=23 // pred_check
          %p143 = pneg %p36
        $region26: #{tpu_custom_call.1} parent=23 // pred_check_branch
          %145 = sbr.rel (%p143) target = $region28
        $region27: #{tpu_custom_call.1} parent=23 // pred_region
          %s146 = sand.u32 %s26, 1
          %s147 = scalar_lea.sflag [#allocation3], %s146
          %s148 = sand.u32 %s26, 1
          %s149 = smul.addr %s148, 32
          %s150 = scalar_lea.vmem [#allocation2], %s149
          %s152 = ssub.s32 512, 512
          %153 = vsyncadd %s147, %s152
          %s154 = smul.addr %s16, 4
          %s155 = smul.addr %s154, 128
          %s156 = scalar_lea.hbm %s0, %s155
          %s158 = sshll.u32 %s150, 4
          %s159 = int_to_ptr.vmem [resolvable:$true] %s158
          %161 = dma.hbm_to_vmem [thread:$0]  %s156, 512, %s159, %s147
        $region28: #{tpu_custom_call.1} parent=23 // pred_fallthru
          _
      $region24: #{tpu_custom_call.1} parent=5 // pred_fallthru
        _
      %p162 = scmp.le.s32.totalorder 1, %s16
      %p163 = scmp.lt.s32.totalorder %s16, 3
      %p164 = pnand %p162, %p163
      %p165 = pneg %p164
      // Predicated region
      $region29: #{tpu_custom_call.1} parent=5 // pred_check
        _
      $region30: #{tpu_custom_call.1} parent=5 // pred_check_branch
        %167 = sbr.rel (%p164) target = $region32
      $region31: #{tpu_custom_call.1} parent=5 // pred_region
        %s168 = ssub.s32 %s16, 1
        %s169 = sand.u32 %s29, 1
        %s170 = scalar_lea.sflag [#allocation3], %s169
        %s171 = sand.u32 %s29, 1
        %s172 = smul.addr %s171, 32
        %s173 = scalar_lea.vmem [#allocation2], %s172
        // Predicated region
        $region33: #{tpu_custom_call.1} parent=31 // pred_check
          %p174 = pneg %p42
        $region34: #{tpu_custom_call.1} parent=31 // pred_check_branch
          %176 = sbr.rel (%p174) target = $region36
        $region35: #{tpu_custom_call.1} parent=31 // pred_region
          %177 = dma.done %s170, 512
        $region36: #{tpu_custom_call.1} parent=31 // pred_fallthru
          _
        // Predicated region
        $region37: #{tpu_custom_call.1} parent=31 // pred_check
          %p178 = pneg %p63
        $region38: #{tpu_custom_call.1} parent=31 // pred_check_branch
          %180 = sbr.rel (%p178) target = $region40
        $region39: #{tpu_custom_call.1} parent=31 // pred_region
          %181 = dma.done [#allocation6], 64
        $region40: #{tpu_custom_call.1} parent=31 // pred_fallthru
          _
        %s182 = sand.u32 %s29, 1
        %s183 = scalar_lea.sflag [#allocation3], %s182
        %s184 = sand.u32 %s29, 1
        %s185 = smul.addr %s184, 32
        %s186 = scalar_lea.vmem [#allocation2], %s185
        %p187 = pneg %p42
        %p188 = pneg %p39
        %p189 = pneg %p63
        %p190 = pneg %p60
        %p191 = pneg %p84
        %p192 = pneg %p81
        %p193 = pneg %p110
        %p194 = pneg %p107
        %s195 = sand.u32 %s97, 1
        %s196 = scalar_lea.sflag [#allocation4], %s195
        %s197 = sand.u32 %s97, 1
        %s198 = smul.addr %s197, 32
        %s199 = scalar_lea.vmem [#allocation7], %s198
        %v200 = vld [vmem:[%s173] sm:$0xff]
        %v201 = vld [vmem:[%s173 + $0x8] sm:$0xff]
        %v202 = vld [vmem:[%s173 + $0x10] sm:$0xff]
        %v203 = vld [vmem:[%s173 + $0x18] sm:$0xff]
        %v204 = vadd.f32 %v200, %v201
        %v205 = vadd.f32 %v204, %v202
        %v206 = vadd.f32 %v205, %v203
        %207 = vadd.xlane.f32.xlu0 %v206
        %v208 = vpop.xlane.xlu0 %207
        %v209 = vmul.f32 %v200, %v200
        %v210 = vmul.f32 %v201, %v201
        %v211 = vmul.f32 %v202, %v202
        %v212 = vmul.f32 %v203, %v203
        %v213 = vadd.f32 %v209, %v210
        %v214 = vadd.f32 %v213, %v211
        %v215 = vadd.f32 %v214, %v212
        %216 = vadd.xlane.f32.xlu0 %v215
        %v217 = vpop.xlane.xlu0 %216
        %v218 = vmul.f32 %v208, 0.001953125
        %v219 = vmul.f32 %v217, 0.001953125
        %v220 = vmul.f32 %v218, %v218
        %v221 = vsub.f32 %v219, %v220
        %v222 = vmax.f32 %v221, 0.0
        %v223 = vadd.f32 %v222, 1e-06
        %v224 = vrsqrt.pop %v223
        %v225 = vsub.f32 %v200, %v218
        %v226 = vsub.f32 %v201, %v218
        %v227 = vsub.f32 %v202, %v218
        %v228 = vsub.f32 %v203, %v218
        %v229 = vmul.f32 %v225, %v224
        %v230 = vmul.f32 %v226, %v224
        %v231 = vmul.f32 %v227, %v224
        %v232 = vmul.f32 %v228, %v224
        %v233 = vld [vmem:[#allocation5] sm:$0xf]
        %v235 = vlaneseq
        %v236 = vshrl.u32 %v235, 7
        %v237 = vsub.s32 0, %v236
        %v238 = vrot.slane %v233, %v237
        %v239 = vlaneseq
        %v240 = vshrl.u32 %v239, 7
        %v241 = vsub.s32 1, %v240
        %v242 = vrot.slane %v233, %v241
        %v243 = vlaneseq
        %v244 = vshrl.u32 %v243, 7
        %v245 = vsub.s32 2, %v244
        %v246 = vrot.slane %v233, %v245
        %v247 = vlaneseq
        %v248 = vshrl.u32 %v247, 7
        %v249 = vsub.s32 3, %v248
        %v250 = vrot.slane %v233, %v249
        %v255 = vmul.f32 %v229, %v238
        %v256 = vmul.f32 %v230, %v242
        %v257 = vmul.f32 %v231, %v246
        %v258 = vmul.f32 %v232, %v250
        %v259 = vld [vmem:[%s2] sm:$0xf]
        %v261 = vlaneseq
        %v262 = vshrl.u32 %v261, 7
        %v263 = vsub.s32 0, %v262
        %v264 = vrot.slane %v259, %v263
        %v265 = vlaneseq
        %v266 = vshrl.u32 %v265, 7
        %v267 = vsub.s32 1, %v266
        %v268 = vrot.slane %v259, %v267
        %v269 = vlaneseq
        %v270 = vshrl.u32 %v269, 7
        %v271 = vsub.s32 2, %v270
        %v272 = vrot.slane %v259, %v271
        %v273 = vlaneseq
        %v274 = vshrl.u32 %v273, 7
        %v275 = vsub.s32 3, %v274
        %v276 = vrot.slane %v259, %v275
        %v281 = vadd.f32 %v255, %v264
        %v282 = vadd.f32 %v256, %v268
        %v283 = vadd.f32 %v257, %v272
        %v284 = vadd.f32 %v258, %v276
        %285 = vst [vmem:[%s199] sm:$0xff] %v281
        %286 = vst [vmem:[%s199 + $0x8] sm:$0xff] %v282
        %287 = vst [vmem:[%s199 + $0x10] sm:$0xff] %v283
        %288 = vst [vmem:[%s199 + $0x18] sm:$0xff] %v284
        %s289 = sand.u32 %s97, 1
        %s290 = scalar_lea.sflag [#allocation4], %s289
        %s291 = sand.u32 %s97, 1
        %s292 = smul.addr %s291, 32
        %s293 = scalar_lea.vmem [#allocation7], %s292
        // Predicated region
        $region41: #{tpu_custom_call.1} parent=31 // pred_check
          %p294 = pneg %p107
        $region42: #{tpu_custom_call.1} parent=31 // pred_check_branch
          %296 = sbr.rel (%p294) target = $region44
        $region43: #{tpu_custom_call.1} parent=31 // pred_region
          %s298 = ssub.s32 512, 512
          %299 = vsyncadd %s290, %s298
          %s300 = smul.addr %s21, 4
          %s301 = smul.addr %s300, 128
          %s302 = scalar_lea.hbm %s3, %s301
          %s304 = sshll.u32 %s293, 4
          %s305 = int_to_ptr.vmem [resolvable:$true] %s304
          %307 = dma.vmem_to_hbm [thread:$0]  %s305, 512, %s302, %s290
        $region44: #{tpu_custom_call.1} parent=31 // pred_fallthru
          _
      $region32: #{tpu_custom_call.1} parent=5 // pred_fallthru
        _
      %p308 = scmp.le.s32.totalorder 2, %s16
      // Predicated region
      $region45: #{tpu_custom_call.1} parent=5 // pred_check
        %p309 = pneg %p308
      $region46: #{tpu_custom_call.1} parent=5 // pred_check_branch
        %311 = sbr.rel (%p309) target = $region48
      $region47: #{tpu_custom_call.1} parent=5 // pred_region
        %s312 = ssub.s32 %s16, 2
        // Predicated region
        $region49: #{tpu_custom_call.1} parent=47 // pred_check
          %p313 = pneg %p113
        $region50: #{tpu_custom_call.1} parent=47 // pred_check_branch
          %315 = sbr.rel (%p313) target = $region52
        $region51: #{tpu_custom_call.1} parent=47 // pred_region
          %s316 = sand.u32 %s98, 1
          %s317 = scalar_lea.sflag [#allocation4], %s316
          %s318 = sand.u32 %s98, 1
          %s319 = smul.addr %s318, 32
          %s320 = scalar_lea.vmem [#allocation7], %s319
          %321 = dma.done %s317, 512
        $region52: #{tpu_custom_call.1} parent=47 // pred_fallthru
          _
      $region48: #{tpu_custom_call.1} parent=5 // pred_fallthru
        _
    $region6: #{tpu_custom_call.1} parent=1 // loop_footer
      %s20 = sadd.s32 1, %s16
    $region7: #{tpu_custom_call.1} parent=1 // loop_footer_branch
      %15 = sbr.rel target = $region3
    $region8: #{tpu_custom_call.1} parent=1 // loop_exit
      _
    %322 = vsyncpa [#allocation3], 1
    %s323 = scalar_lea.sflag [#allocation3], 1
    %324 = vsyncpa %s323, 1
    %325 = vsyncpa [#allocation6], 1
    %326 = vsyncpa [#allocation4], 1
    %s327 = scalar_lea.sflag [#allocation4], 1
    %328 = vsyncpa %s327, 1

</llo_original>
